<compile_context>
chip_gen: v5e
topology: v5e:2x2
jax: 0.10.0
libtpu: 0.0.40
codegen_flags: <defaults>
</compile_context>

<pallas_src>
import math
import functools

import jax
import jax.numpy as jnp
from jax.experimental import pallas as pl
from jax.experimental.pallas import tpu as pltpu


# ----------------------------------------------------------------------------
# pe buffer construction (deterministic, same formula as the PyTorch __init__)
# ----------------------------------------------------------------------------
def make_pe(d_model: int, max_len: int = 100) -> jnp.ndarray:
    assert d_model % 2 == 0, "d_model must be even (same constraint torch hits)"
    position = jnp.arange(max_len, dtype=jnp.float32)[:, None]          # (L, 1)
    div_term = jnp.exp(
        jnp.arange(0, d_model, 2, dtype=jnp.float32) * (-math.log(10000.0) / d_model)
    )                                                                    # (D/2,)
    pe = jnp.zeros((max_len, d_model), dtype=jnp.float32)
    pe = pe.at[:, 0::2].set(jnp.sin(position * div_term))
    pe = pe.at[:, 1::2].set(jnp.cos(position * div_term))
    return pe[:, None, :]                                                # (L, 1, D)


# ----------------------------------------------------------------------------
# Pallas kernels
# ----------------------------------------------------------------------------
def _pe_add_kernel(x_ref, pe_ref, o_ref, *, batch):
    # x_ref: (TS, B*D)   pe_ref: (TS, D)
    pe_blk = pe_ref[...]
    if batch > 1:
        pe_blk = jnp.concatenate([pe_blk] * batch, axis=-1)   # (TS, B*D)
    o_ref[...] = (x_ref[...] + pe_blk).astype(o_ref.dtype)


def _pe_add_dropout_kernel(x_ref, pe_ref, bits_ref, o_ref, *, batch, threshold, scale):
    # x_ref/bits_ref: (TS, B*D)   pe_ref: (TS, D)
    pe_blk = pe_ref[...]
    if batch > 1:
        pe_blk = jnp.concatenate([pe_blk] * batch, axis=-1)
    y = x_ref[...] + pe_blk
    # integer-space inverted dropout: P(keep) = 1 - p
    keep = bits_ref[...] >= jnp.uint32(threshold)
    y = jnp.where(keep, y * scale, jnp.zeros_like(y))
    o_ref[...] = y.astype(o_ref.dtype)


# ----------------------------------------------------------------------------
# Tiling helper
# ----------------------------------------------------------------------------
def _pick_block_rows(n_rows: int, row_bytes: int, target_bytes: int = 2 * 1024 * 1024) -> int:
    """Rows of x per grid step: big enough to amortize ~0.35us/step overhead,
    small enough that the double-buffered working set fits scoped VMEM on all
    generations (incl. v7x's 64 MiB), multiple of 8 (sublane granularity)."""
    if n_rows <= 8:
        return n_rows                       # block == full dim (always legal)
    t = max(1, target_bytes // max(1, row_bytes))
    t = max(8, (t // 8) * 8)
    # prefer >= 2 grid steps so both v7x TensorCores get work
    t = min(t, max(8, (((n_rows + 1) // 2) // 8) * 8))
    t = min(t, (n_rows // 8) * 8)
    return t


# ----------------------------------------------------------------------------
# Wrapper: y = dropout(x + pe[:S])
# ----------------------------------------------------------------------------
def positional_encoding(x, pe, *, p=0.1, training=False, rng_key=None):
    """x: (S, B, D); pe: (max_len, 1, D). Returns (S, B, D) in x.dtype."""
    S, B, D = x.shape
    assert pe.shape[0] >= S and pe.shape[1] == 1 and pe.shape[2] == D
    dtype = x.dtype
    BD = B * D

    # lane-dense 2-D views (free bitcast-style reshapes in XLA)
    x2 = x.reshape(S, BD)
    pe2 = pe.reshape(pe.shape[0], D).astype(dtype)   # compute in input dtype

    TS = _pick_block_rows(S, BD * dtype.itemsize)
    if TS % 8 != 0:
        # only when S < 8: make the pe block equal its full leading dim
        pe2 = pe2[:S]

    grid = (pl.cdiv(S, TS),)
    x_spec = pl.BlockSpec((TS, BD), lambda i: (i, 0))
    pe_spec = pl.BlockSpec((TS, D), lambda i: (i, 0))
    out_spec = pl.BlockSpec((TS, BD), lambda i: (i, 0))

    use_dropout = bool(training) and float(p) > 0.0
    if use_dropout:
        assert 0.0 < p < 1.0, "dropout p must be in [0, 1) for the training path"
        if rng_key is None:
            rng_key = jax.random.PRNGKey(0)
        # TODO(synk): cannot bit-match torch.nn.Dropout's RNG stream; mask is a
        # deterministic function of rng_key only (independent of tiling).
        bits = jax.random.bits(rng_key, (S, BD), dtype=jnp.uint32)
        threshold = min(int(round(float(p) * 2.0 ** 32)), 2 ** 32 - 1)
        kernel = functools.partial(
            _pe_add_dropout_kernel, batch=B, threshold=threshold,
            scale=1.0 / (1.0 - float(p)),
        )
        in_specs = [x_spec, pe_spec, x_spec]
        args = (x2, pe2, bits)
    else:
        kernel = functools.partial(_pe_add_kernel, batch=B)
        in_specs = [x_spec, pe_spec]
        args = (x2, pe2)

    y2 = pl.pallas_call(
        kernel,
        out_shape=jax.ShapeDtypeStruct((S, BD), dtype),
        grid_spec=pltpu.PrefetchScalarGridSpec(
            num_scalar_prefetch=0,
            grid=grid,
            in_specs=in_specs,
            out_specs=out_spec,
        ),
        compiler_params=pltpu.CompilerParams(
            dimension_semantics=("parallel",),
            vmem_limit_bytes=32 * 1024 * 1024,   # safe on v5e/v6e/v7x
        ),
    )(*args)
    return y2.reshape(S, B, D)


# ----------------------------------------------------------------------------
if __name__ == "__main__":
    d_model = 128
    max_len = 100
    S, B = 16, 2
    p = 0.1

    pe = make_pe(d_model, max_len)                       # (max_len, 1, D)

    key = jax.random.PRNGKey(0)
    x_key, drop_key = jax.random.split(key)
    x = jax.random.normal(x_key, (S, B, d_model), dtype=jnp.float32)

    # eval mode (dropout = identity): exact semantics check vs reference
    y = positional_encoding(x, pe, p=p, training=False)
    y = jax.block_until_ready(y)
    y_ref = x + pe[:S]
    assert jnp.allclose(y, y_ref, atol=1e-6, rtol=1e-6), "eval-mode mismatch"

    # training mode: inverted dropout driven by externally generated bits
    y_tr = positional_encoding(x, pe, p=p, training=True, rng_key=drop_key)
    y_tr = jax.block_until_ready(y_tr)
    bits = jax.random.bits(drop_key, (S, B * d_model), dtype=jnp.uint32)
    keep = (bits >= jnp.uint32(min(int(round(p * 2.0 ** 32)), 2 ** 32 - 1))).reshape(S, B, d_model)
    y_tr_ref = jnp.where(keep, (x + pe[:S]) * (1.0 / (1.0 - p)), 0.0)
    assert jnp.allclose(y_tr, y_tr_ref, atol=1e-5, rtol=1e-5), "train-mode mismatch"

    print("KERNEL_OK")
</pallas_src>

<mosaic_0001>
module attributes {stable_mosaic.version = 11 : i64} {
  func.func @_pe_add_kernel(%arg0: i32, %arg1: memref<8x256xf32, #tpu.memory_space<vmem>>, %arg2: memref<8x128xf32, #tpu.memory_space<vmem>>, %arg3: memref<8x256xf32, #tpu.memory_space<vmem>>) attributes {dimension_semantics = [#tpu.dimension_semantics<parallel>], iteration_bounds = array<i64: 2>, scalar_prefetch = 0 : i64, scratch_operands = 0 : i64, tpu.core_type = #tpu.core_type<tc>, window_params = [{transform_indices = @transform_0, window_bounds = array<i64: 8, 256>}, {transform_indices = @transform_1, window_bounds = array<i64: 8, 128>}, {transform_indices = @transform_2, window_bounds = array<i64: 8, 256>}]} {
    %c0 = arith.constant 0 : index
    %c0_0 = arith.constant 0 : index
    %0 = vector.load %arg2[%c0, %c0_0] : memref<8x128xf32, #tpu.memory_space<vmem>>, vector<8x128xf32>
    %1 = tpu.concatenate %0, %0 in 1 : vector<8x128xf32>, vector<8x128xf32> -> vector<8x256xf32>
    %c0_1 = arith.constant 0 : index
    %c0_2 = arith.constant 0 : index
    %2 = vector.load %arg1[%c0_1, %c0_2] : memref<8x256xf32, #tpu.memory_space<vmem>>, vector<8x256xf32>
    %3 = arith.addf %2, %1 : vector<8x256xf32>
    %c0_3 = arith.constant 0 : index
    %c0_4 = arith.constant 0 : index
    %4 = vector.load %arg3[%c0_3, %c0_4] : memref<8x256xf32, #tpu.memory_space<vmem>>, vector<8x256xf32>
    tpu.vector_store %arg3[%c0_3, %c0_4], %3 {strides = array<i32>} : memref<8x256xf32, #tpu.memory_space<vmem>>, vector<8x256xf32>,
    return
  }
  func.func @transform_0(%arg0: i32) -> (i32, i32) {
    %c0_i32 = arith.constant 0 : i32
    %c0_i32_0 = arith.constant 0 : i32
    return %arg0, %c0_i32 : i32, i32
  }
  func.func @transform_1(%arg0: i32) -> (i32, i32) {
    %c0_i32 = arith.constant 0 : i32
    %c0_i32_0 = arith.constant 0 : i32
    return %arg0, %c0_i32 : i32, i32
  }
  func.func @transform_2(%arg0: i32) -> (i32, i32) {
    %c0_i32 = arith.constant 0 : i32
    %c0_i32_0 = arith.constant 0 : i32
    return %arg0, %c0_i32 : i32, i32
  }
}

</mosaic_0001>

<llo_original>
// kernel: tpu_custom_call.1
$region0: #{tpu_custom_call.1}
  #allocation0 [shape = 'u32[]', space=smem, size = 0x4, offset = 0x4, fixed_abs, tag = 'smem constant byte address 0x4 - core index']
  #allocation1 [shape = 'u32[72,128]{1,0:T(1,128)}', space=vmem, size = 0x9000, scoped, tag = 'internal scratch']
  %s0 = inlined_call_operand.hbm [shape: f32[16,256], index: 0, kind: input, shape index: {}]
  %s1 = inlined_call_operand.hbm [shape: f32[100,128], index: 1, kind: input, shape index: {}]
  %s2 = inlined_call_operand.hbm [shape: f32[16,256], index: 2, kind: output, shape index: {}]
  %s3 = sld [smem:[#allocation0]]
  $region49: #{tpu_custom_call.1} parent=0
    _
  %s5 = ssub.s32 1, %s3
  %s6 = scalar_select 0, %s5, %s3
  $region1: #{tpu_custom_call.1} parent=0
    #allocation2 [shape = 'u8[16384]{0}', space=vmem, size = 0x4000, scoped, tag = 'input window, operand 0']
    #allocation3 [shape = 's32[2]{0}', space=sflag, size = 0x8, scoped, tag = 'scoped memory for tpu_custom_call.1']
    #allocation4 [shape = 's32[2]{0}', space=sflag, size = 0x8, scoped, tag = 'scoped memory for tpu_custom_call.1']
    #allocation5 [shape = 'u8[8192]{0}', space=vmem, size = 0x2000, scoped, tag = 'input window, operand 1']
    #allocation6 [shape = 's32[2]{0}', space=sflag, size = 0x8, scoped, tag = 'scoped memory for tpu_custom_call.1']
    #allocation7 [shape = 'u8[16384]{0}', space=vmem, size = 0x4000, scoped, tag = 'output window, operand 0']
    %7 = vsyncpa [#allocation3], 0
    %s8 = scalar_lea.sflag [#allocation3], 1
    %9 = vsyncpa %s8, 0
    %10 = vsyncpa [#allocation6], 0
    %s11 = scalar_lea.sflag [#allocation6], 1
    %12 = vsyncpa %s11, 0
    %13 = vsyncpa [#allocation4], 0
    %s14 = scalar_lea.sflag [#allocation4], 1
    %15 = vsyncpa %s14, 0
    loop: start=0, step=1, limit=4
    $region2: #{tpu_custom_call.1} parent=1 // loop_pre_header
      _
    $region3: #{tpu_custom_call.1} parent=1 // loop_header
      %s17 = sphi 0, %s21
      %p18 = scmp.ge.s32.totalorder %s17, 4
      %s27 = sphi 0, %s29
      %s30 = sphi 0, %s27
      %s31 = sphi 0, %s30
      %s47 = sphi 0, %s31
      %s53 = sphi 0, %s55
      %s56 = sphi 0, %s53
      %s57 = sphi 0, %s56
      %s73 = sphi 0, %s57
      %s79 = sphi 0, %s81
      %s82 = sphi 0, %s79
      %s83 = sphi 0, %s82
      %s99 = sphi 0, %s83
    $region4: #{tpu_custom_call.1} parent=1 // loop_header_branch
      %20 = sbr.rel (%p18) target = $region8
    $region5: #{tpu_custom_call.1} parent=1 // loop_body
      %s22 = ssub.s32 %s17, 1
      %s23 = ssub.s32 %s17, 2
      %s24 = sadd.s32 %s17, 1
      %s25 = ssub.s32 %s17, %s24
      %p26 = scmp.eq.s32.totalorder %s25, 0
      %s28 = sadd.s32 %s27, 1
      %s29 = scalar_select %p26, %s27, %s28
      %p32 = pneg %p26
      %p33 = scmp.eq.s32.totalorder %s17, 1
      %p34 = por %p32, %p33
      %p35 = scmp.ne.s32.totalorder %s27, %s30
      %p36 = scmp.eq.s32.totalorder %s17, 0
      %p37 = por %p35, %p36
      %p38 = scmp.ne.s32.totalorder %s27, %s30
      %p39 = scmp.eq.s32.totalorder %s22, 1
      %p40 = por %p38, %p39
      %p41 = scmp.ne.s32.totalorder %s30, %s31
      %p42 = scmp.eq.s32.totalorder %s22, 0
      %p43 = por %p41, %p42
      %p44 = scmp.ne.s32.totalorder %s30, %s31
      %p45 = scmp.eq.s32.totalorder %s23, 1
      %p46 = por %p44, %p45
      %p48 = scmp.ne.s32.totalorder %s31, %s47
      %p49 = scmp.eq.s32.totalorder %s23, 0
      %p50 = por %p48, %p49
      %s51 = ssub.s32 %s17, %s24
      %p52 = scmp.eq.s32.totalorder %s51, 0
      %s54 = sadd.s32 %s53, 1
      %s55 = scalar_select %p52, %s53, %s54
      %p58 = pneg %p52
      %p59 = scmp.eq.s32.totalorder %s17, 1
      %p60 = por %p58, %p59
      %p61 = scmp.ne.s32.totalorder %s53, %s56
      %p62 = scmp.eq.s32.totalorder %s17, 0
      %p63 = por %p61, %p62
      %p64 = scmp.ne.s32.totalorder %s53, %s56
      %p65 = scmp.eq.s32.totalorder %s22, 1
      %p66 = por %p64, %p65
      %p67 = scmp.ne.s32.totalorder %s56, %s57
      %p68 = scmp.eq.s32.totalorder %s22, 0
      %p69 = por %p67, %p68
      %p70 = scmp.ne.s32.totalorder %s56, %s57
      %p71 = scmp.eq.s32.totalorder %s23, 1
      %p72 = por %p70, %p71
      %p74 = scmp.ne.s32.totalorder %s57, %s73
      %p75 = scmp.eq.s32.totalorder %s23, 0
      %p76 = por %p74, %p75
      %s77 = ssub.s32 %s17, %s24
      %p78 = scmp.eq.s32.totalorder %s77, 0
      %s80 = sadd.s32 %s79, 1
      %s81 = scalar_select %p78, %s79, %s80
      %p84 = pneg %p78
      %p85 = scmp.eq.s32.totalorder %s17, 1
      %p86 = por %p84, %p85
      %p87 = scmp.ne.s32.totalorder %s79, %s82
      %p88 = scmp.eq.s32.totalorder %s17, 0
      %p89 = por %p87, %p88
      %p90 = scmp.ne.s32.totalorder %s79, %s82
      %p91 = scmp.eq.s32.totalorder %s22, 1
      %p92 = por %p90, %p91
      %p93 = scmp.ne.s32.totalorder %s82, %s83
      %p94 = scmp.eq.s32.totalorder %s22, 0
      %p95 = por %p93, %p94
      %p96 = scmp.ne.s32.totalorder %s82, %s83
      %p97 = scmp.eq.s32.totalorder %s23, 1
      %p98 = por %p96, %p97
      %p100 = scmp.ne.s32.totalorder %s83, %s99
      %p101 = scmp.eq.s32.totalorder %s23, 0
      %p102 = por %p100, %p101
      %p103 = scmp.le.s32.totalorder 1, %s17
      %p104 = scmp.lt.s32.totalorder %s17, 3
      %p105 = pnand %p103, %p104
      %p106 = pneg %p105
      // Predicated region
      $region9: #{tpu_custom_call.1} parent=5 // pred_check
        _
      $region10: #{tpu_custom_call.1} parent=5 // pred_check_branch
        %108 = sbr.rel (%p105) target = $region12
      $region11: #{tpu_custom_call.1} parent=5 // pred_region
        %s109 = ssub.s32 %s17, 1
      $region12: #{tpu_custom_call.1} parent=5 // pred_fallthru
        _
      %p110 = scmp.lt.s32.totalorder %s17, 2
      // Predicated region
      $region13: #{tpu_custom_call.1} parent=5 // pred_check
        %p111 = pneg %p110
      $region14: #{tpu_custom_call.1} parent=5 // pred_check_branch
        %113 = sbr.rel (%p111) target = $region16
      $region15: #{tpu_custom_call.1} parent=5 // pred_region
        // Predicated region
        $region17: #{tpu_custom_call.1} parent=15 // pred_check
          %p114 = pneg %p37
        $region18: #{tpu_custom_call.1} parent=15 // pred_check_branch
          %116 = sbr.rel (%p114) target = $region20
        $region19: #{tpu_custom_call.1} parent=15 // pred_region
          %s117 = sand.u32 %s27, 1
          %s118 = scalar_lea.sflag [#allocation3], %s117
          %s119 = sand.u32 %s27, 1
          %s120 = smul.addr %s119, 16
          %s121 = scalar_lea.vmem [#allocation2], %s120
          %123 = vsyncadd %s118, 0
          %s124 = smul.addr %s17, 2
          %s125 = smul.addr %s124, 8
          %s126 = scalar_lea.hbm %s0, %s125
          %s128 = sshll.u32 %s126, 4
          %s129 = int_to_ptr.hbm [resolvable:$true] %s128
          %s130 = sshll.u32 %s121, 4
          %s131 = int_to_ptr.vmem [resolvable:$true] %s130
          %133 = dma.hbm_to_vmem [thread:$0]  %s129, 256, %s131, %s118
        $region20: #{tpu_custom_call.1} parent=15 // pred_fallthru
          _
        // Predicated region
        $region21: #{tpu_custom_call.1} parent=15 // pred_check
          %p134 = pneg %p63
        $region22: #{tpu_custom_call.1} parent=15 // pred_check_branch
          %136 = sbr.rel (%p134) target = $region24
        $region23: #{tpu_custom_call.1} parent=15 // pred_region
          %s137 = sand.u32 %s53, 1
          %s138 = scalar_lea.sflag [#allocation6], %s137
          %s139 = sand.u32 %s53, 1
          %s140 = smul.addr %s139, 8
          %s141 = scalar_lea.vmem [#allocation5], %s140
          %143 = vsyncadd %s138, 0
          %s144 = smul.addr %s17, 8
          %s145 = scalar_lea.hbm %s1, %s144
          %s147 = sshll.u32 %s145, 4
          %s148 = int_to_ptr.hbm [resolvable:$true] %s147
          %s149 = sshll.u32 %s141, 4
          %s150 = int_to_ptr.vmem [resolvable:$true] %s149
          %152 = dma.hbm_to_vmem [thread:$0]  %s148, 128, %s150, %s138
        $region24: #{tpu_custom_call.1} parent=15 // pred_fallthru
          _
      $region16: #{tpu_custom_call.1} parent=5 // pred_fallthru
        _
      %p153 = scmp.le.s32.totalorder 1, %s17
      %p154 = scmp.lt.s32.totalorder %s17, 3
      %p155 = pnand %p153, %p154
      %p156 = pneg %p155
      // Predicated region
      $region25: #{tpu_custom_call.1} parent=5 // pred_check
        _
      $region26: #{tpu_custom_call.1} parent=5 // pred_check_branch
        %158 = sbr.rel (%p155) target = $region28
      $region27: #{tpu_custom_call.1} parent=5 // pred_region
        %s159 = ssub.s32 %s17, 1
        %s160 = sand.u32 %s30, 1
        %s161 = scalar_lea.sflag [#allocation3], %s160
        %s162 = sand.u32 %s30, 1
        %s163 = smul.addr %s162, 16
        %s164 = scalar_lea.vmem [#allocation2], %s163
        // Predicated region
        $region29: #{tpu_custom_call.1} parent=27 // pred_check
          %p165 = pneg %p43
        $region30: #{tpu_custom_call.1} parent=27 // pred_check_branch
          %167 = sbr.rel (%p165) target = $region32
        $region31: #{tpu_custom_call.1} parent=27 // pred_region
          %169 = dma.done %s161, 256
        $region32: #{tpu_custom_call.1} parent=27 // pred_fallthru
          _
        %s170 = sand.u32 %s56, 1
        %s171 = scalar_lea.sflag [#allocation6], %s170
        %s172 = sand.u32 %s56, 1
        %s173 = smul.addr %s172, 8
        %s174 = scalar_lea.vmem [#allocation5], %s173
        // Predicated region
        $region33: #{tpu_custom_call.1} parent=27 // pred_check
          %p175 = pneg %p69
        $region34: #{tpu_custom_call.1} parent=27 // pred_check_branch
          %177 = sbr.rel (%p175) target = $region36
        $region35: #{tpu_custom_call.1} parent=27 // pred_region
          %179 = dma.done %s171, 128
        $region36: #{tpu_custom_call.1} parent=27 // pred_fallthru
          _
        %s180 = sand.u32 %s30, 1
        %s181 = scalar_lea.sflag [#allocation3], %s180
        %s182 = sand.u32 %s30, 1
        %s183 = smul.addr %s182, 16
        %s184 = scalar_lea.vmem [#allocation2], %s183
        %p185 = pneg %p43
        %p186 = pneg %p40
        %s187 = sand.u32 %s56, 1
        %s188 = scalar_lea.sflag [#allocation6], %s187
        %s189 = sand.u32 %s56, 1
        %s190 = smul.addr %s189, 8
        %s191 = scalar_lea.vmem [#allocation5], %s190
        %p192 = pneg %p69
        %p193 = pneg %p66
        %p194 = pneg %p95
        %p195 = pneg %p92
        %s196 = sand.u32 %s82, 1
        %s197 = scalar_lea.sflag [#allocation4], %s196
        %s198 = sand.u32 %s82, 1
        %s199 = smul.addr %s198, 16
        %s200 = scalar_lea.vmem [#allocation7], %s199
        %v201 = vld [vmem:[%s174] sm:$0xff]
        %v202 = vld [vmem:[%s164] sm:$0xff]
        %v203 = vld [vmem:[%s164 + $0x8] sm:$0xff]
        %v204 = vadd.f32 %v202, %v201
        %v205 = vadd.f32 %v203, %v201
        %206 = vst [vmem:[%s200] sm:$0xff] %v204
        %207 = vst [vmem:[%s200 + $0x8] sm:$0xff] %v205
        %s208 = sand.u32 %s82, 1
        %s209 = scalar_lea.sflag [#allocation4], %s208
        %s210 = sand.u32 %s82, 1
        %s211 = smul.addr %s210, 16
        %s212 = scalar_lea.vmem [#allocation7], %s211
        // Predicated region
        $region37: #{tpu_custom_call.1} parent=27 // pred_check
          %p213 = pneg %p92
        $region38: #{tpu_custom_call.1} parent=27 // pred_check_branch
          %215 = sbr.rel (%p213) target = $region40
        $region39: #{tpu_custom_call.1} parent=27 // pred_region
          %217 = vsyncadd %s209, 0
          %s218 = smul.addr %s22, 2
          %s219 = smul.addr %s218, 8
          %s220 = scalar_lea.hbm %s2, %s219
          %s222 = sshll.u32 %s212, 4
          %s223 = int_to_ptr.vmem [resolvable:$true] %s222
          %s224 = sshll.u32 %s220, 4
          %s225 = int_to_ptr.hbm [resolvable:$true] %s224
          %227 = dma.vmem_to_hbm [thread:$0]  %s223, 256, %s225, %s209
        $region40: #{tpu_custom_call.1} parent=27 // pred_fallthru
          _
      $region28: #{tpu_custom_call.1} parent=5 // pred_fallthru
        _
      %p228 = scmp.le.s32.totalorder 2, %s17
      // Predicated region
      $region41: #{tpu_custom_call.1} parent=5 // pred_check
        %p229 = pneg %p228
      $region42: #{tpu_custom_call.1} parent=5 // pred_check_branch
        %231 = sbr.rel (%p229) target = $region44
      $region43: #{tpu_custom_call.1} parent=5 // pred_region
        %s232 = ssub.s32 %s17, 2
        // Predicated region
        $region45: #{tpu_custom_call.1} parent=43 // pred_check
          %p233 = pneg %p98
        $region46: #{tpu_custom_call.1} parent=43 // pred_check_branch
          %235 = sbr.rel (%p233) target = $region48
        $region47: #{tpu_custom_call.1} parent=43 // pred_region
          %s236 = sand.u32 %s83, 1
          %s237 = scalar_lea.sflag [#allocation4], %s236
          %s238 = sand.u32 %s83, 1
          %s239 = smul.addr %s238, 16
          %s240 = scalar_lea.vmem [#allocation7], %s239
          %242 = dma.done %s237, 256
        $region48: #{tpu_custom_call.1} parent=43 // pred_fallthru
          _
      $region44: #{tpu_custom_call.1} parent=5 // pred_fallthru
        _
    $region6: #{tpu_custom_call.1} parent=1 // loop_footer
      %s21 = sadd.s32 1, %s17
    $region7: #{tpu_custom_call.1} parent=1 // loop_footer_branch
      %16 = sbr.rel target = $region3
    $region8: #{tpu_custom_call.1} parent=1 // loop_exit
      _
    %243 = vsyncpa [#allocation3], 1
    %s244 = scalar_lea.sflag [#allocation3], 1
    %245 = vsyncpa %s244, 1
    %246 = vsyncpa [#allocation6], 1
    %s247 = scalar_lea.sflag [#allocation6], 1
    %248 = vsyncpa %s247, 1
    %249 = vsyncpa [#allocation4], 1
    %s250 = scalar_lea.sflag [#allocation4], 1
    %251 = vsyncpa %s250, 1

</llo_original>
